<compile_context>
chip_gen: v7x
topology: tpu7x:2x2x1
jax: 0.10.0
libtpu: 0.0.40
codegen_flags: <defaults>
</compile_context>

<pallas_src>
import functools

import jax
import jax.numpy as jnp
from jax import lax
from jax.experimental import pallas as pl
from jax.experimental.pallas import tpu as pltpu


# ------------------------------ fused kernel --------------------------------


def _bn_train(h, eps):
    """Non-affine BatchNorm1d, training mode (batch stats, biased variance)."""
    mean = jnp.mean(h, axis=0, keepdims=True)
    var = jnp.mean(jnp.square(h - mean), axis=0, keepdims=True)
    return (h - mean) * lax.rsqrt(var + eps)


def _bn_affine_relu(h, gamma, beta, eps):
    """Affine BN + ReLU.  Views live in disjoint column blocks, so per-column
    batch stats are automatically per-view stats (matches the PyTorch ref)."""
    return jnp.maximum(_bn_train(h, eps) * gamma + beta, 0.0)


def _bt_fused_kernel(x_ref, w1_ref, bias1_ref, g1_ref, b1_ref,
                     w2_ref, g2_ref, b2_ref, w3_ref, loss_ref,
                     *, lamda, eps, batch, proj_dim):
    # x: (B, C*H*W) f32, read once; cast to bf16 only for the MXU.
    x = x_ref[...].astype(jnp.bfloat16)

    # Backbone linear + projector layer-1 linear (folded):
    # columns [0:hidden) = view1, [hidden:2*hidden) = view2 (flipped).
    h = jnp.dot(x, w1_ref[...], preferred_element_type=jnp.float32) + bias1_ref[...]
    h = _bn_affine_relu(h, g1_ref[...], b1_ref[...], eps)            # (B, 2*hid)

    # Projector layer 2 (block-diagonal weights -> single lane-dense dot).
    h = jnp.dot(h.astype(jnp.bfloat16), w2_ref[...],
                preferred_element_type=jnp.float32)
    h = _bn_affine_relu(h, g2_ref[...], b2_ref[...], eps)            # (B, 2*hid)

    # Projector layer 3 (block-diagonal) -> (B, 2*D); columns split per view.
    z = jnp.dot(h.astype(jnp.bfloat16), w3_ref[...],
                preferred_element_type=jnp.float32)

    # Final non-affine BN (per-column == per-view), then cross-correlation.
    zn = _bn_train(z, eps)                                           # (B, 2*D)
    z1n = zn[:, :proj_dim]                                           # (B, D)
    z2n = zn[:, proj_dim:]                                           # (B, D)

    inv_b = jnp.float32(1.0 / batch)
    # c = bn(z1).T @ bn(z2) / B  -- kept in f32 (loss-critical, tiny).
    c = lax.dot_general(z1n, z2n, (((0,), (0,)), ((), ())),
                        preferred_element_type=jnp.float32) * inv_b  # (D, D)

    # Diagonal computed directly: no (D,D) iotas / masks / selects.
    diag = jnp.sum(z1n * z2n, axis=0, keepdims=True) * inv_b         # (1, D)

    total_sq = jnp.sum(c * c)                       # sum of all c_ij^2
    diag_sq = jnp.sum(diag * diag)                  # sum of c_ii^2
    on_diag = jnp.sum(jnp.square(diag - 1.0))       # sum (c_ii - 1)^2
    off_diag = total_sq - diag_sq                   # sum_{i != j} c_ij^2
    loss_ref[0, 0] = on_diag + jnp.float32(lamda) * off_diag


# ------------------------------ model wrapper --------------------------------


def init_params(key, in_flat, feature_size, hidden_dim, projection_dim):
    ks = jax.random.split(key, 4)
    scale = 0.02
    return {
        # simple linear backbone: flatten(NCHW) -> feature_size
        "w_bb": scale * jax.random.normal(ks[0], (in_flat, feature_size), jnp.float32),
        # projector layer1: feature_size -> hidden (Linear no-bias + BN affine + ReLU)
        "w1": scale * jax.random.normal(ks[1], (feature_size, hidden_dim), jnp.float32),
        "g1": jnp.ones((1, hidden_dim), jnp.float32),
        "b1": jnp.zeros((1, hidden_dim), jnp.float32),
        # projector layer2: hidden -> hidden
        "w2": scale * jax.random.normal(ks[2], (hidden_dim, hidden_dim), jnp.float32),
        "g2": jnp.ones((1, hidden_dim), jnp.float32),
        "b2": jnp.zeros((1, hidden_dim), jnp.float32),
        # projector layer3: hidden -> projection_dim (Linear no-bias)
        "w3": scale * jax.random.normal(ks[3], (hidden_dim, projection_dim), jnp.float32),
    }


def _block_diag2(w):
    """[[w, 0], [0, w]] -- lets both views share one lane-dense matmul."""
    k, n = w.shape
    z = jnp.zeros((k, n), w.dtype)
    top = jnp.concatenate([w, z], axis=1)
    bot = jnp.concatenate([z, w], axis=1)
    return jnp.concatenate([top, bot], axis=0)


def prepare_params(params, image_shape, mean=(0.5,), std=(0.229, 0.224, 0.225)):
    """One-time weight preprocessing.

    Folds torchvision Normalize (per-channel mean/std; a length-1 mean broadcasts
    over channels exactly like torchvision does) and the deterministic horizontal
    flip of the 'prime' view into the backbone weights, then folds projector
    layer-1 (no bias, no nonlinearity in between) into the backbone as well.
    Per-view weights are laid out as column blocks / block-diagonals so the
    kernel never concatenates or row-slices, and matmul weights are stored bf16.
    """
    C, H, W = image_shape
    mean_f = jnp.broadcast_to(
        jnp.asarray(mean, jnp.float32).reshape(-1, 1, 1), (C, H, W)).reshape(-1)
    std_f = jnp.broadcast_to(
        jnp.asarray(std, jnp.float32).reshape(-1, 1, 1), (C, H, W)).reshape(-1)
    inv_std = 1.0 / std_f

    w_eff = params["w_bb"] * inv_std[:, None]                        # (C*H*W, F)
    bias_bb = (-(mean_f * inv_std))[None, :] @ params["w_bb"]        # (1, F)
    # flip along W on the input side == permute the rows of the effective weight
    w_eff_flip = w_eff.reshape(C, H, W, -1)[:, :, ::-1, :].reshape(C * H * W, -1)

    w1 = params["w1"]
    wa1 = w_eff @ w1                                                 # (C*H*W, hid)
    wb1 = w_eff_flip @ w1
    bias1 = bias_bb @ w1                                             # (1, hid)

    prep = {
        "wl1": jnp.concatenate([wa1, wb1], axis=1).astype(jnp.bfloat16),   # (CHW, 2*hid)
        "bias1": jnp.concatenate([bias1, bias1], axis=1),                  # (1, 2*hid) f32
        "g1": jnp.concatenate([params["g1"], params["g1"]], axis=1),
        "b1": jnp.concatenate([params["b1"], params["b1"]], axis=1),
        "w2": _block_diag2(params["w2"]).astype(jnp.bfloat16),             # (2*hid, 2*hid)
        "g2": jnp.concatenate([params["g2"], params["g2"]], axis=1),
        "b2": jnp.concatenate([params["b2"], params["b2"]], axis=1),
        "w3": _block_diag2(params["w3"]).astype(jnp.bfloat16),             # (2*hid, 2*D)
    }
    return prep


def barlow_twins_forward(x, prep, lamda=0.005, eps=1e-5):
    """x: (B, C, H, W) float32, NCHW like PyTorch. Returns scalar loss."""
    B = x.shape[0]
    x_flat = x.reshape(B, -1)

    K = x_flat.shape[1]
    N1 = prep["wl1"].shape[1]
    N2 = prep["w2"].shape[1]
    N3 = prep["w3"].shape[1]
    D = N3 // 2

    operands = (x_flat,
                prep["wl1"], prep["bias1"], prep["g1"], prep["b1"],
                prep["w2"], prep["g2"], prep["b2"],
                prep["w3"])

    flops = 2 * B * (K * N1 + N1 * N2 + N2 * N3) + 2 * B * D * D
    transcendentals = 2 * N1 + 2 * N2 + N3              # rsqrt per BN column
    bytes_accessed = sum(int(op.size) * op.dtype.itemsize for op in operands) + 4

    out = pl.pallas_call(
        functools.partial(_bt_fused_kernel, lamda=lamda, eps=eps,
                          batch=B, proj_dim=D),
        in_specs=[pl.BlockSpec(memory_space=pltpu.MemorySpace.VMEM)
                  for _ in operands],
        out_specs=pl.BlockSpec(memory_space=pltpu.MemorySpace.SMEM),
        out_shape=jax.ShapeDtypeStruct((1, 1), jnp.float32),
        cost_estimate=pl.CostEstimate(flops=flops,
                                      transcendentals=transcendentals,
                                      bytes_accessed=bytes_accessed),
    )(*operands)
    return out[0, 0]


# ---------------------------------- main -------------------------------------


if __name__ == "__main__":
    # Small shapes consistent with the module's forward.
    B, C, H, W = 8, 3, 16, 16
    feature_size = 32
    hidden_dim = 64
    projection_dim = 128
    lamda = 0.005

    key = jax.random.PRNGKey(0)
    k_x, k_p = jax.random.split(key)
    x = jax.random.uniform(k_x, (B, C, H, W), jnp.float32)

    params = init_params(k_p, C * H * W, feature_size, hidden_dim, projection_dim)
    prep = prepare_params(params, (C, H, W))

    loss = barlow_twins_forward(x, prep, lamda=lamda)
    jax.block_until_ready(loss)
    print("KERNEL_OK")
</pallas_src>

<mosaic_0001>
module attributes {stable_mosaic.version = 11 : i64} {
  func.func @_bt_fused_kernel(%arg0: memref<8x768xf32, #tpu.memory_space<vmem>>, %arg1: memref<768x128xbf16, #tpu.memory_space<vmem>>, %arg2: memref<1x128xf32, #tpu.memory_space<vmem>>, %arg3: memref<1x128xf32, #tpu.memory_space<vmem>>, %arg4: memref<1x128xf32, #tpu.memory_space<vmem>>, %arg5: memref<128x128xbf16, #tpu.memory_space<vmem>>, %arg6: memref<1x128xf32, #tpu.memory_space<vmem>>, %arg7: memref<1x128xf32, #tpu.memory_space<vmem>>, %arg8: memref<128x256xbf16, #tpu.memory_space<vmem>>, %arg9: memref<1x1xf32, #tpu.memory_space<smem>>) attributes {dimension_semantics = [], scalar_prefetch = 0 : i64, scratch_operands = 0 : i64, tpu.core_type = #tpu.core_type<tc>} {
    %c0 = arith.constant 0 : index
    %c0_0 = arith.constant 0 : index
    %0 = vector.load %arg0[%c0, %c0_0] : memref<8x768xf32, #tpu.memory_space<vmem>>, vector<8x768xf32>
    %1 = arith.truncf %0 : vector<8x768xf32> to vector<8x768xbf16>
    %c0_1 = arith.constant 0 : index
    %c0_2 = arith.constant 0 : index
    %2 = vector.load %arg1[%c0_1, %c0_2] : memref<768x128xbf16, #tpu.memory_space<vmem>>, vector<768x128xbf16>
    %cst = arith.constant dense<0.000000e+00> : vector<8x128xf32>
    %3 = tpu.matmul %1, %2, %cst {dimension_numbers = #tpu.dot_dimension_numbers<[1], [0], [0], [1], [0, 0, 1, 1], [], []>} : vector<8x768xbf16>, vector<768x128xbf16>, vector<8x128xf32> -> vector<8x128xf32>
    %c0_3 = arith.constant 0 : index
    %c0_4 = arith.constant 0 : index
    %4 = vector.load %arg2[%c0_3, %c0_4] : memref<1x128xf32, #tpu.memory_space<vmem>>, vector<1x128xf32>
    %5 = vector.broadcast %4 : vector<1x128xf32> to vector<8x128xf32>
    %6 = arith.addf %3, %5 : vector<8x128xf32>
    %c0_5 = arith.constant 0 : index
    %c0_6 = arith.constant 0 : index
    %7 = vector.load %arg3[%c0_5, %c0_6] : memref<1x128xf32, #tpu.memory_space<vmem>>, vector<1x128xf32>
    %c0_7 = arith.constant 0 : index
    %c0_8 = arith.constant 0 : index
    %8 = vector.load %arg4[%c0_7, %c0_8] : memref<1x128xf32, #tpu.memory_space<vmem>>, vector<1x128xf32>
    %cst_9 = arith.constant dense<0.000000e+00> : vector<128xf32>
    %9 = vector.multi_reduction <add>, %6, %cst_9 [0] : vector<8x128xf32> to vector<128xf32>
    %10 = vector.shape_cast %9 : vector<128xf32> to vector<1x128xf32>
    %cst_10 = arith.constant 8.000000e+00 : f32
    %11 = vector.broadcast %cst_10 : f32 to vector<1x128xf32>
    %12 = arith.divf %10, %11 : vector<1x128xf32>
    %13 = vector.broadcast %12 : vector<1x128xf32> to vector<8x128xf32>
    %14 = arith.subf %6, %13 : vector<8x128xf32>
    %15 = arith.mulf %14, %14 : vector<8x128xf32>
    %cst_11 = arith.constant dense<0.000000e+00> : vector<128xf32>
    %16 = vector.multi_reduction <add>, %15, %cst_11 [0] : vector<8x128xf32> to vector<128xf32>
    %17 = vector.shape_cast %16 : vector<128xf32> to vector<1x128xf32>
    %cst_12 = arith.constant 8.000000e+00 : f32
    %18 = vector.broadcast %cst_12 : f32 to vector<1x128xf32>
    %19 = arith.divf %17, %18 : vector<1x128xf32>
    %20 = vector.broadcast %12 : vector<1x128xf32> to vector<8x128xf32>
    %21 = arith.subf %6, %20 : vector<8x128xf32>
    %cst_13 = arith.constant 9.99999974E-6 : f32
    %22 = vector.broadcast %cst_13 : f32 to vector<1x128xf32>
    %23 = arith.addf %19, %22 : vector<1x128xf32>
    %24 = math.rsqrt %23 : vector<1x128xf32>
    %25 = vector.broadcast %24 : vector<1x128xf32> to vector<8x128xf32>
    %26 = arith.mulf %21, %25 : vector<8x128xf32>
    %27 = vector.broadcast %7 : vector<1x128xf32> to vector<8x128xf32>
    %28 = arith.mulf %26, %27 : vector<8x128xf32>
    %29 = vector.broadcast %8 : vector<1x128xf32> to vector<8x128xf32>
    %30 = arith.addf %28, %29 : vector<8x128xf32>
    %cst_14 = arith.constant 0.000000e+00 : f32
    %31 = vector.broadcast %cst_14 : f32 to vector<8x128xf32>
    %32 = arith.maximumf %30, %31 : vector<8x128xf32>
    %33 = arith.truncf %32 : vector<8x128xf32> to vector<8x128xbf16>
    %c0_15 = arith.constant 0 : index
    %c0_16 = arith.constant 0 : index
    %34 = vector.load %arg5[%c0_15, %c0_16] : memref<128x128xbf16, #tpu.memory_space<vmem>>, vector<128x128xbf16>
    %cst_17 = arith.constant dense<0.000000e+00> : vector<8x128xf32>
    %35 = tpu.matmul %33, %34, %cst_17 {dimension_numbers = #tpu.dot_dimension_numbers<[1], [0], [0], [1], [0, 0, 1, 1], [], []>} : vector<8x128xbf16>, vector<128x128xbf16>, vector<8x128xf32> -> vector<8x128xf32>
    %c0_18 = arith.constant 0 : index
    %c0_19 = arith.constant 0 : index
    %36 = vector.load %arg6[%c0_18, %c0_19] : memref<1x128xf32, #tpu.memory_space<vmem>>, vector<1x128xf32>
    %c0_20 = arith.constant 0 : index
    %c0_21 = arith.constant 0 : index
    %37 = vector.load %arg7[%c0_20, %c0_21] : memref<1x128xf32, #tpu.memory_space<vmem>>, vector<1x128xf32>
    %cst_22 = arith.constant dense<0.000000e+00> : vector<128xf32>
    %38 = vector.multi_reduction <add>, %35, %cst_22 [0] : vector<8x128xf32> to vector<128xf32>
    %39 = vector.shape_cast %38 : vector<128xf32> to vector<1x128xf32>
    %cst_23 = arith.constant 8.000000e+00 : f32
    %40 = vector.broadcast %cst_23 : f32 to vector<1x128xf32>
    %41 = arith.divf %39, %40 : vector<1x128xf32>
    %42 = vector.broadcast %41 : vector<1x128xf32> to vector<8x128xf32>
    %43 = arith.subf %35, %42 : vector<8x128xf32>
    %44 = arith.mulf %43, %43 : vector<8x128xf32>
    %cst_24 = arith.constant dense<0.000000e+00> : vector<128xf32>
    %45 = vector.multi_reduction <add>, %44, %cst_24 [0] : vector<8x128xf32> to vector<128xf32>
    %46 = vector.shape_cast %45 : vector<128xf32> to vector<1x128xf32>
    %cst_25 = arith.constant 8.000000e+00 : f32
    %47 = vector.broadcast %cst_25 : f32 to vector<1x128xf32>
    %48 = arith.divf %46, %47 : vector<1x128xf32>
    %49 = vector.broadcast %41 : vector<1x128xf32> to vector<8x128xf32>
    %50 = arith.subf %35, %49 : vector<8x128xf32>
    %cst_26 = arith.constant 9.99999974E-6 : f32
    %51 = vector.broadcast %cst_26 : f32 to vector<1x128xf32>
    %52 = arith.addf %48, %51 : vector<1x128xf32>
    %53 = math.rsqrt %52 : vector<1x128xf32>
    %54 = vector.broadcast %53 : vector<1x128xf32> to vector<8x128xf32>
    %55 = arith.mulf %50, %54 : vector<8x128xf32>
    %56 = vector.broadcast %36 : vector<1x128xf32> to vector<8x128xf32>
    %57 = arith.mulf %55, %56 : vector<8x128xf32>
    %58 = vector.broadcast %37 : vector<1x128xf32> to vector<8x128xf32>
    %59 = arith.addf %57, %58 : vector<8x128xf32>
    %cst_27 = arith.constant 0.000000e+00 : f32
    %60 = vector.broadcast %cst_27 : f32 to vector<8x128xf32>
    %61 = arith.maximumf %59, %60 : vector<8x128xf32>
    %62 = arith.truncf %61 : vector<8x128xf32> to vector<8x128xbf16>
    %c0_28 = arith.constant 0 : index
    %c0_29 = arith.constant 0 : index
    %63 = vector.load %arg8[%c0_28, %c0_29] : memref<128x256xbf16, #tpu.memory_space<vmem>>, vector<128x256xbf16>
    %cst_30 = arith.constant dense<0.000000e+00> : vector<8x256xf32>
    %64 = tpu.matmul %62, %63, %cst_30 {dimension_numbers = #tpu.dot_dimension_numbers<[1], [0], [0], [1], [0, 0, 1, 1], [], []>} : vector<8x128xbf16>, vector<128x256xbf16>, vector<8x256xf32> -> vector<8x256xf32>
    %cst_31 = arith.constant dense<0.000000e+00> : vector<256xf32>
    %65 = vector.multi_reduction <add>, %64, %cst_31 [0] : vector<8x256xf32> to vector<256xf32>
    %66 = vector.shape_cast %65 : vector<256xf32> to vector<1x256xf32>
    %cst_32 = arith.constant 8.000000e+00 : f32
    %67 = vector.broadcast %cst_32 : f32 to vector<1x256xf32>
    %68 = arith.divf %66, %67 : vector<1x256xf32>
    %69 = vector.broadcast %68 : vector<1x256xf32> to vector<8x256xf32>
    %70 = arith.subf %64, %69 : vector<8x256xf32>
    %71 = arith.mulf %70, %70 : vector<8x256xf32>
    %cst_33 = arith.constant dense<0.000000e+00> : vector<256xf32>
    %72 = vector.multi_reduction <add>, %71, %cst_33 [0] : vector<8x256xf32> to vector<256xf32>
    %73 = vector.shape_cast %72 : vector<256xf32> to vector<1x256xf32>
    %cst_34 = arith.constant 8.000000e+00 : f32
    %74 = vector.broadcast %cst_34 : f32 to vector<1x256xf32>
    %75 = arith.divf %73, %74 : vector<1x256xf32>
    %76 = vector.broadcast %68 : vector<1x256xf32> to vector<8x256xf32>
    %77 = arith.subf %64, %76 : vector<8x256xf32>
    %cst_35 = arith.constant 9.99999974E-6 : f32
    %78 = vector.broadcast %cst_35 : f32 to vector<1x256xf32>
    %79 = arith.addf %75, %78 : vector<1x256xf32>
    %80 = math.rsqrt %79 : vector<1x256xf32>
    %81 = vector.broadcast %80 : vector<1x256xf32> to vector<8x256xf32>
    %82 = arith.mulf %77, %81 : vector<8x256xf32>
    %83 = vector.extract_strided_slice %82 {offsets = [0, 0], sizes = [8, 128], strides = [1, 1]} : vector<8x256xf32> to vector<8x128xf32>
    %84 = vector.extract_strided_slice %82 {offsets = [0, 128], sizes = [8, 128], strides = [1, 1]} : vector<8x256xf32> to vector<8x128xf32>
    %cst_36 = arith.constant dense<0.000000e+00> : vector<128x128xf32>
    %85 = tpu.matmul %83, %84, %cst_36 {dimension_numbers = #tpu.dot_dimension_numbers<[0], [0], [1], [1], [0, 1, 1, 1], [], []>} : vector<8x128xf32>, vector<8x128xf32>, vector<128x128xf32> -> vector<128x128xf32>
    %cst_37 = arith.constant 1.250000e-01 : f32
    %86 = vector.broadcast %cst_37 : f32 to vector<128x128xf32>
    %87 = arith.mulf %85, %86 : vector<128x128xf32>
    %88 = arith.mulf %83, %84 : vector<8x128xf32>
    %cst_38 = arith.constant dense<0.000000e+00> : vector<128xf32>
    %89 = vector.multi_reduction <add>, %88, %cst_38 [0] : vector<8x128xf32> to vector<128xf32>
    %90 = vector.shape_cast %89 : vector<128xf32> to vector<1x128xf32>
    %cst_39 = arith.constant 1.250000e-01 : f32
    %91 = vector.broadcast %cst_39 : f32 to vector<1x128xf32>
    %92 = arith.mulf %90, %91 : vector<1x128xf32>
    %93 = arith.mulf %87, %87 : vector<128x128xf32>
    %94 = vector.shape_cast %93 : vector<128x128xf32> to vector<1x128x128xf32>
    %cst_40 = arith.constant dense<0.000000e+00> : vector<1xf32>
    %95 = vector.multi_reduction <add>, %94, %cst_40 [1, 2] : vector<1x128x128xf32> to vector<1xf32>
    %96 = vector.shape_cast %95 : vector<1xf32> to vector<1x1x1xf32>
    %97 = vector.extract %96[0, 0, 0] : f32 from vector<1x1x1xf32>
    %98 = arith.mulf %92, %92 : vector<1x128xf32>
    %99 = vector.shape_cast %98 : vector<1x128xf32> to vector<1x1x128xf32>
    %cst_41 = arith.constant dense<0.000000e+00> : vector<1xf32>
    %100 = vector.multi_reduction <add>, %99, %cst_41 [1, 2] : vector<1x1x128xf32> to vector<1xf32>
    %101 = vector.shape_cast %100 : vector<1xf32> to vector<1x1x1xf32>
    %102 = vector.extract %101[0, 0, 0] : f32 from vector<1x1x1xf32>
    %cst_42 = arith.constant 1.000000e+00 : f32
    %103 = vector.broadcast %cst_42 : f32 to vector<1x128xf32>
    %104 = arith.subf %92, %103 : vector<1x128xf32>
    %105 = arith.mulf %104, %104 : vector<1x128xf32>
    %106 = vector.shape_cast %105 : vector<1x128xf32> to vector<1x1x128xf32>
    %cst_43 = arith.constant dense<0.000000e+00> : vector<1xf32>
    %107 = vector.multi_reduction <add>, %106, %cst_43 [1, 2] : vector<1x1x128xf32> to vector<1xf32>
    %108 = vector.shape_cast %107 : vector<1xf32> to vector<1x1x1xf32>
    %109 = vector.extract %108[0, 0, 0] : f32 from vector<1x1x1xf32>
    %110 = arith.subf %97, %102 : f32
    %cst_44 = arith.constant 5.000000e-03 : f32
    %111 = arith.mulf %cst_44, %110 : f32
    %112 = arith.addf %109, %111 : f32
    %c0_45 = arith.constant 0 : index
    %c0_46 = arith.constant 0 : index
    %113 = memref.load %arg9[%c0_45, %c0_46] : memref<1x1xf32, #tpu.memory_space<smem>>
    memref.store %112, %arg9[%c0_45, %c0_46] : memref<1x1xf32, #tpu.memory_space<smem>>
    return
  }
}

</mosaic_0001>

<llo_original>
// kernel: tpu_custom_call.1
$region0: #{tpu_custom_call.1}
  #allocation0 [shape = 'u32[]', space=smem, size = 0x4, offset = 0x4, fixed_abs, tag = 'smem constant byte address 0x4 - core index']
  #allocation1 [shape = 'u32[144,128]{1,0:T(1,128)}', space=vmem, size = 0x12000, scoped, tag = 'internal scratch']
  %s0 = inlined_call_operand.hbm [shape: f32[8,768], index: 0, kind: input, shape index: {}]
  %s1 = inlined_call_operand.hbm [shape: bf16[768,128], index: 1, kind: input, shape index: {}]
  %s2 = inlined_call_operand.vmem [shape: f32[1,128], index: 2, kind: input, shape index: {}]
  %s3 = inlined_call_operand.vmem [shape: f32[1,128], index: 3, kind: input, shape index: {}]
  %s4 = inlined_call_operand.vmem [shape: f32[1,128], index: 4, kind: input, shape index: {}]
  %s5 = inlined_call_operand.hbm [shape: bf16[128,128], index: 5, kind: input, shape index: {}]
  %s6 = inlined_call_operand.vmem [shape: f32[1,128], index: 6, kind: input, shape index: {}]
  %s7 = inlined_call_operand.vmem [shape: f32[1,128], index: 7, kind: input, shape index: {}]
  %s8 = inlined_call_operand.hbm [shape: bf16[128,256], index: 8, kind: input, shape index: {}]
  %s9 = inlined_call_operand.hbm [shape: f32[1,1], index: 9, kind: output, shape index: {}]
  %s10 = sld [smem:[#allocation0]]
  $region62: #{tpu_custom_call.1} parent=0
    _
  %s12 = ssub.s32 1, %s10
  %s13 = scalar_select 0, %s12, %s10
  $region1: #{tpu_custom_call.1} parent=0
    #allocation2 [shape = 'u8[24576]{0}', space=vmem, size = 0x6000, scoped, tag = 'input window, operand 0, single buffered']
    #allocation3 [shape = 's32[1]{0}', space=sflag, size = 0x4, scoped, tag = 'scoped memory for tpu_custom_call.1']
    #allocation4 [shape = 's32[1]{0}', space=sflag, size = 0x4, scoped, tag = 'scoped memory for tpu_custom_call.1']
    #allocation5 [shape = 'u8[196608]{0}', space=vmem, size = 0x30000, scoped, tag = 'input window, operand 1, single buffered']
    #allocation6 [shape = 's32[1]{0}', space=sflag, size = 0x4, scoped, tag = 'scoped memory for tpu_custom_call.1']
    #allocation7 [shape = 'u8[32768]{0}', space=vmem, size = 0x8000, scoped, tag = 'input window, operand 5, single buffered']
    #allocation8 [shape = 'u8[65536]{0}', space=vmem, size = 0x10000, scoped, tag = 'input window, operand 8, single buffered']
    #allocation9 [shape = 's32[1]{0}', space=sflag, size = 0x4, scoped, tag = 'scoped memory for tpu_custom_call.1']
    #allocation10 [shape = 'u8[512]{0}', space=smem, size = 0x200, scoped, tag = 'output window, operand 0, single buffered']
    %14 = vsyncpa [#allocation3], 0
    %15 = vsyncpa [#allocation6], 0
    %16 = vsyncpa [#allocation9], 0
    %17 = vsyncpa [#allocation4], 0
    // Predicated region
    $region2: #{tpu_custom_call.1} parent=1 // pred_check
      _
    $region3: #{tpu_custom_call.1} parent=1 // pred_check_branch
      %19 = sbr.rel (0) target = $region5
    $region4: #{tpu_custom_call.1} parent=1 // pred_region
      %s21 = ssub.s32 768, 768
      %22 = vsyncadd [#allocation3], %s21
      %s24 = sshll.u32 [#allocation2], 4
      %s25 = int_to_ptr.vmem [resolvable:$true] %s24
      %27 = dma.hbm_to_vmem [thread:$0]  %s0, 768, %s25, [#allocation3]
    $region5: #{tpu_custom_call.1} parent=1 // pred_fallthru
      _
    // Predicated region
    $region6: #{tpu_custom_call.1} parent=1 // pred_check
      _
    $region7: #{tpu_custom_call.1} parent=1 // pred_check_branch
      %29 = sbr.rel (0) target = $region9
    $region8: #{tpu_custom_call.1} parent=1 // pred_region
      %s31 = ssub.s32 6144, 6144
      %32 = vsyncadd [#allocation6], %s31
      %s33 = sshll.u32 [#allocation5], 4
      %s34 = int_to_ptr.vmem [resolvable:$true] %s33
      %39 = dma.hbm_to_vmem [thread:$0]  %s1, 6144, %s34, [#allocation6], 64, 64, 4
    $region9: #{tpu_custom_call.1} parent=1 // pred_fallthru
      _
    // Predicated region
    $region10: #{tpu_custom_call.1} parent=1 // pred_check
      _
    $region11: #{tpu_custom_call.1} parent=1 // pred_check_branch
      %41 = sbr.rel (0) target = $region13
    $region12: #{tpu_custom_call.1} parent=1 // pred_region
      _
    $region13: #{tpu_custom_call.1} parent=1 // pred_fallthru
      _
    // Predicated region
    $region14: #{tpu_custom_call.1} parent=1 // pred_check
      _
    $region15: #{tpu_custom_call.1} parent=1 // pred_check_branch
      %43 = sbr.rel (0) target = $region17
    $region16: #{tpu_custom_call.1} parent=1 // pred_region
      _
    $region17: #{tpu_custom_call.1} parent=1 // pred_fallthru
      _
    // Predicated region
    $region18: #{tpu_custom_call.1} parent=1 // pred_check
      _
    $region19: #{tpu_custom_call.1} parent=1 // pred_check_branch
      %45 = sbr.rel (0) target = $region21
    $region20: #{tpu_custom_call.1} parent=1 // pred_region
      _
    $region21: #{tpu_custom_call.1} parent=1 // pred_fallthru
      _
    // Predicated region
    $region22: #{tpu_custom_call.1} parent=1 // pred_check
      _
    $region23: #{tpu_custom_call.1} parent=1 // pred_check_branch
      %47 = sbr.rel (0) target = $region25
    $region24: #{tpu_custom_call.1} parent=1 // pred_region
      %s49 = ssub.s32 1024, 1024
      %50 = vsyncadd [#allocation6], %s49
      %s51 = sshll.u32 [#allocation7], 4
      %s52 = int_to_ptr.vmem [resolvable:$true] %s51
      %57 = dma.hbm_to_vmem [thread:$0]  %s5, 1024, %s52, [#allocation6], 64, 64, 4
    $region25: #{tpu_custom_call.1} parent=1 // pred_fallthru
      _
    // Predicated region
    $region26: #{tpu_custom_call.1} parent=1 // pred_check
      _
    $region27: #{tpu_custom_call.1} parent=1 // pred_check_branch
      %59 = sbr.rel (0) target = $region29
    $region28: #{tpu_custom_call.1} parent=1 // pred_region
      _
    $region29: #{tpu_custom_call.1} parent=1 // pred_fallthru
      _
    // Predicated region
    $region30: #{tpu_custom_call.1} parent=1 // pred_check
      _
    $region31: #{tpu_custom_call.1} parent=1 // pred_check_branch
      %61 = sbr.rel (0) target = $region33
    $region32: #{tpu_custom_call.1} parent=1 // pred_region
      _
    $region33: #{tpu_custom_call.1} parent=1 // pred_fallthru
      _
    // Predicated region
    $region34: #{tpu_custom_call.1} parent=1 // pred_check
      _
    $region35: #{tpu_custom_call.1} parent=1 // pred_check_branch
      %63 = sbr.rel (0) target = $region37
    $region36: #{tpu_custom_call.1} parent=1 // pred_region
      %s65 = ssub.s32 2048, 2048
      %66 = vsyncadd [#allocation9], %s65
      %s67 = sshll.u32 [#allocation8], 4
      %s68 = int_to_ptr.vmem [resolvable:$true] %s67
      %73 = dma.hbm_to_vmem [thread:$0]  %s8, 2048, %s68, [#allocation9], 128, 128, 8
    $region37: #{tpu_custom_call.1} parent=1 // pred_fallthru
      _
    // Predicated region
    $region38: #{tpu_custom_call.1} parent=1 // pred_check
      _
    $region39: #{tpu_custom_call.1} parent=1 // pred_check_branch
      %75 = sbr.rel (0) target = $region41
    $region40: #{tpu_custom_call.1} parent=1 // pred_region
      %76 = dma.done [#allocation3], 768
    $region41: #{tpu_custom_call.1} parent=1 // pred_fallthru
      _
    // Predicated region
    $region42: #{tpu_custom_call.1} parent=1 // pred_check
      _
    $region43: #{tpu_custom_call.1} parent=1 // pred_check_branch
      %78 = sbr.rel (0) target = $region45
    $region44: #{tpu_custom_call.1} parent=1 // pred_region
      %79 = dma.done [#allocation6], 6144
    $region45: #{tpu_custom_call.1} parent=1 // pred_fallthru
      _
    // Predicated region
    $region46: #{tpu_custom_call.1} parent=1 // pred_check
      _
    $region47: #{tpu_custom_call.1} parent=1 // pred_check_branch
      %81 = sbr.rel (0) target = $region49
    $region48: #{tpu_custom_call.1} parent=1 // pred_region
      %82 = dma.done [#allocation6], 1024
    $region49: #{tpu_custom_call.1} parent=1 // pred_fallthru
      _
    // Predicated region
    $region50: #{tpu_custom_call.1} parent=1 // pred_check
      _
    $region51: #{tpu_custom_call.1} parent=1 // pred_check_branch
      %84 = sbr.rel (0) target = $region53
    $region52: #{tpu_custom_call.1} parent=1 // pred_region
      %85 = dma.done [#allocation9], 2048
    $region53: #{tpu_custom_call.1} parent=1 // pred_fallthru
      _
    %v87 = vld [vmem:[#allocation2] sm:$0xff]
    %v88 = vld [vmem:[#allocation2 + $0x8] sm:$0xff]
    %v89 = vld [vmem:[#allocation2 + $0x10] sm:$0xff]
    %v90 = vld [vmem:[#allocation2 + $0x18] sm:$0xff]
    %v91 = vld [vmem:[#allocation2 + $0x20] sm:$0xff]
    %v92 = vld [vmem:[#allocation2 + $0x28] sm:$0xff]
    %v93 = vpack.c.bf16 %v87, %v87
    %v94 = vpack.c.bf16 %v88, %v88
    %v95 = vpack.c.bf16 %v89, %v89
    %v96 = vpack.c.bf16 %v90, %v90
    %v97 = vpack.c.bf16 %v91, %v91
    %v98 = vpack.c.bf16 %v92, %v92
    %v99 = vld [vmem:[#allocation5] sm:$0xf]
    %v100 = vld [vmem:[#allocation5 + $0x4] sm:$0xf]
    %v101 = vld [vmem:[#allocation5 + $0x8] sm:$0xf]
    %v102 = vld [vmem:[#allocation5 + $0xc] sm:$0xf]
    %v103 = vld [vmem:[#allocation5 + $0x10] sm:$0xf]
    %v104 = vld [vmem:[#allocation5 + $0x14] sm:$0xf]
    %v105 = vld [vmem:[#allocation5 + $0x18] sm:$0xf]
    %v106 = vld [vmem:[#allocation5 + $0x1c] sm:$0xf]
    %v107 = vld [vmem:[#allocation5 + $0x20] sm:$0xf]
    %v108 = vld [vmem:[#allocation5 + $0x24] sm:$0xf]
    %v109 = vld [vmem:[#allocation5 + $0x28] sm:$0xf]
    %v110 = vld [vmem:[#allocation5 + $0x2c] sm:$0xf]
    %v111 = vld [vmem:[#allocation5 + $0x30] sm:$0xf]
    %v112 = vld [vmem:[#allocation5 + $0x34] sm:$0xf]
    %v113 = vld [vmem:[#allocation5 + $0x38] sm:$0xf]
    %v114 = vld [vmem:[#allocation5 + $0x3c] sm:$0xf]
    %v115 = vld [vmem:[#allocation5 + $0x40] sm:$0xf]
    %v116 = vld [vmem:[#allocation5 + $0x44] sm:$0xf]
    %v117 = vld [vmem:[#allocation5 + $0x48] sm:$0xf]
    %v118 = vld [vmem:[#allocation5 + $0x4c] sm:$0xf]
    %v119 = vld [vmem:[#allocation5 + $0x50] sm:$0xf]
    %v120 = vld [vmem:[#allocation5 + $0x54] sm:$0xf]
    %v121 = vld [vmem:[#allocation5 + $0x58] sm:$0xf]
    %v122 = vld [vmem:[#allocation5 + $0x5c] sm:$0xf]
    %v123 = vld [vmem:[#allocation5 + $0x60] sm:$0xf]
    %v124 = vld [vmem:[#allocation5 + $0x64] sm:$0xf]
    %v125 = vld [vmem:[#allocation5 + $0x68] sm:$0xf]
    %v126 = vld [vmem:[#allocation5 + $0x6c] sm:$0xf]
    %v127 = vld [vmem:[#allocation5 + $0x70] sm:$0xf]
    %v128 = vld [vmem:[#allocation5 + $0x74] sm:$0xf]
    %v129 = vld [vmem:[#allocation5 + $0x78] sm:$0xf]
    %v130 = vld [vmem:[#allocation5 + $0x7c] sm:$0xf]
    %v131 = vld [vmem:[#allocation5 + $0x80] sm:$0xf]
    %v132 = vld [vmem:[#allocation5 + $0x84] sm:$0xf]
    %v133 = vld [vmem:[#allocation5 + $0x88] sm:$0xf]
    %v134 = vld [vmem:[#allocation5 + $0x8c] sm:$0xf]
    %v135 = vld [vmem:[#allocation5 + $0x90] sm:$0xf]
    %v136 = vld [vmem:[#allocation5 + $0x94] sm:$0xf]
    %v137 = vld [vmem:[#allocation5 + $0x98] sm:$0xf]
    %v138 = vld [vmem:[#allocation5 + $0x9c] sm:$0xf]
    %v139 = vld [vmem:[#allocation5 + $0xa0] sm:$0xf]
    %v140 = vld [vmem:[#allocation5 + $0xa4] sm:$0xf]
    %v141 = vld [vmem:[#allocation5 + $0xa8] sm:$0xf]
    %v142 = vld [vmem:[#allocation5 + $0xac] sm:$0xf]
    %v143 = vld [vmem:[#allocation5 + $0xb0] sm:$0xf]
    %v144 = vld [vmem:[#allocation5 + $0xb4] sm:$0xf]
    %v145 = vld [vmem:[#allocation5 + $0xb8] sm:$0xf]
    %v146 = vld [vmem:[#allocation5 + $0xbc] sm:$0xf]
    %v147 = vld [vmem:[#allocation5 + $0xc0] sm:$0xf]
    %v148 = vld [vmem:[#allocation5 + $0xc4] sm:$0xf]
    %v149 = vld [vmem:[#allocation5 + $0xc8] sm:$0xf]
    %v150 = vld [vmem:[#allocation5 + $0xcc] sm:$0xf]
    %v151 = vld [vmem:[#allocation5 + $0xd0] sm:$0xf]
    %v152 = vld [vmem:[#allocation5 + $0xd4] sm:$0xf]
    %v153 = vld [vmem:[#allocation5 + $0xd8] sm:$0xf]
    %v154 = vld [vmem:[#allocation5 + $0xdc] sm:$0xf]
    %v155 = vld [vmem:[#allocation5 + $0xe0] sm:$0xf]
    %v156 = vld [vmem:[#allocation5 + $0xe4] sm:$0xf]
    %v157 = vld [vmem:[#allocation5 + $0xe8] sm:$0xf]
    %v158 = vld [vmem:[#allocation5 + $0xec] sm:$0xf]
    %v159 = vld [vmem:[#allocation5 + $0xf0] sm:$0xf]
    %v160 = vld [vmem:[#allocation5 + $0xf4] sm:$0xf]
    %v161 = vld [vmem:[#allocation5 + $0xf8] sm:$0xf]
    %v162 = vld [vmem:[#allocation5 + $0xfc] sm:$0xf]
    %v163 = vld [vmem:[#allocation5 + $0x100] sm:$0xf]
    %v164 = vld [vmem:[#allocation5 + $0x104] sm:$0xf]
    %v165 = vld [vmem:[#allocation5 + $0x108] sm:$0xf]
    %v166 = vld [vmem:[#allocation5 + $0x10c] sm:$0xf]
    %v167 = vld [vmem:[#allocation5 + $0x110] sm:$0xf]
    %v168 = vld [vmem:[#allocation5 + $0x114] sm:$0xf]
    %v169 = vld [vmem:[#allocation5 + $0x118] sm:$0xf]
    %v170 = vld [vmem:[#allocation5 + $0x11c] sm:$0xf]
    %v171 = vld [vmem:[#allocation5 + $0x120] sm:$0xf]
    %v172 = vld [vmem:[#allocation5 + $0x124] sm:$0xf]
    %v173 = vld [vmem:[#allocation5 + $0x128] sm:$0xf]
    %v174 = vld [vmem:[#allocation5 + $0x12c] sm:$0xf]
    %v175 = vld [vmem:[#allocation5 + $0x130] sm:$0xf]
    %v176 = vld [vmem:[#allocation5 + $0x134] sm:$0xf]
    %v177 = vld [vmem:[#allocation5 + $0x138] sm:$0xf]
    %v178 = vld [vmem:[#allocation5 + $0x13c] sm:$0xf]
    %v179 = vld [vmem:[#allocation5 + $0x140] sm:$0xf]
    %v180 = vld [vmem:[#allocation5 + $0x144] sm:$0xf]
    %v181 = vld [vmem:[#allocation5 + $0x148] sm:$0xf]
    %v182 = vld [vmem:[#allocation5 + $0x14c] sm:$0xf]
    %v183 = vld [vmem:[#allocation5 + $0x150] sm:$0xf]
    %v184 = vld [vmem:[#allocation5 + $0x154] sm:$0xf]
    %v185 = vld [vmem:[#allocation5 + $0x158] sm:$0xf]
    %v186 = vld [vmem:[#allocation5 + $0x15c] sm:$0xf]
    %v187 = vld [vmem:[#allocation5 + $0x160] sm:$0xf]
    %v188 = vld [vmem:[#allocation5 + $0x164] sm:$0xf]
    %v189 = vld [vmem:[#allocation5 + $0x168] sm:$0xf]
    %v190 = vld [vmem:[#allocation5 + $0x16c] sm:$0xf]
    %v191 = vld [vmem:[#allocation5 + $0x170] sm:$0xf]
    %v192 = vld [vmem:[#allocation5 + $0x174] sm:$0xf]
    %v193 = vld [vmem:[#allocation5 + $0x178] sm:$0xf]
    %v194 = vld [vmem:[#allocation5 + $0x17c] sm:$0xf]
    %v195 = vld [vmem:[%s2] sm:$0x1]
    %v197 = vlaneseq
    %v198 = vshrl.u32 %v197, 7
    %v199 = vsub.s32 0, %v198
    %v200 = vrot.slane %v195, %v199
    %v298 = vunpack.c.l.b16 %v99
    %v299 = vunpack.c.l.b16 %v100
    %v300 = vunpack.c.l.b16 %v101
    %v301 = vunpack.c.l.b16 %v102
    %v302 = vunpack.c.l.b16 %v103
    %v303 = vunpack.c.l.b16 %v104
    %v304 = vunpack.c.l.b16 %v105
    %v305 = vunpack.c.l.b16 %v106
    %v306 = vunpack.c.l.b16 %v107
    %v307 = vunpack.c.l.b16 %v108
    %v308 = vunpack.c.l.b16 %v109
    %v309 = vunpack.c.l.b16 %v110
    %v310 = vunpack.c.l.b16 %v111
    %v311 = vunpack.c.l.b16 %v112
    %v312 = vunpack.c.l.b16 %v113
    %v313 = vunpack.c.l.b16 %v114
    %v314 = vunpack.c.l.b16 %v115
    %v315 = vunpack.c.l.b16 %v116
    %v316 = vunpack.c.l.b16 %v117
    %v317 = vunpack.c.l.b16 %v118
    %v318 = vunpack.c.l.b16 %v119
    %v319 = vunpack.c.l.b16 %v120
    %v320 = vunpack.c.l.b16 %v121
    %v321 = vunpack.c.l.b16 %v122
    %v322 = vunpack.c.l.b16 %v123
    %v323 = vunpack.c.l.b16 %v124
    %v324 = vunpack.c.l.b16 %v125
    %v325 = vunpack.c.l.b16 %v126
    %v326 = vunpack.c.l.b16 %v127
    %v327 = vunpack.c.l.b16 %v128
    %v328 = vunpack.c.l.b16 %v129
    %v329 = vunpack.c.l.b16 %v130
    %v330 = vunpack.c.l.b16 %v131
    %v331 = vunpack.c.l.b16 %v132
    %v332 = vunpack.c.l.b16 %v133
    %v333 = vunpack.c.l.b16 %v134
    %v334 = vunpack.c.l.b16 %v135
    %v335 = vunpack.c.l.b16 %v136
    %v336 = vunpack.c.l.b16 %v137
    %v337 = vunpack.c.l.b16 %v138
    %v338 = vunpack.c.l.b16 %v139
    %v339 = vunpack.c.l.b16 %v140
    %v340 = vunpack.c.l.b16 %v141
    %v341 = vunpack.c.l.b16 %v142
    %v342 = vunpack.c.l.b16 %v143
    %v343 = vunpack.c.l.b16 %v144
    %v344 = vunpack.c.l.b16 %v145
    %v345 = vunpack.c.l.b16 %v146
    %v346 = vunpack.c.l.b16 %v147
    %v347 = vunpack.c.l.b16 %v148
    %v348 = vunpack.c.l.b16 %v149
    %v349 = vunpack.c.l.b16 %v150
    %v350 = vunpack.c.l.b16 %v151
    %v351 = vunpack.c.l.b16 %v152
    %v352 = vunpack.c.l.b16 %v153
    %v353 = vunpack.c.l.b16 %v154
    %v354 = vunpack.c.l.b16 %v155
    %v355 = vunpack.c.l.b16 %v156
    %v356 = vunpack.c.l.b16 %v157
    %v357 = vunpack.c.l.b16 %v158
    %v358 = vunpack.c.l.b16 %v159
    %v359 = vunpack.c.l.b16 %v160
    %v360 = vunpack.c.l.b16 %v161
    %v361 = vunpack.c.l.b16 %v162
    %v362 = vunpack.c.l.b16 %v163
    %v363 = vunpack.c.l.b16 %v164
    %v364 = vunpack.c.l.b16 %v165
    %v365 = vunpack.c.l.b16 %v166
    %v366 = vunpack.c.l.b16 %v167
    %v367 = vunpack.c.l.b16 %v168
    %v368 = vunpack.c.l.b16 %v169
    %v369 = vunpack.c.l.b16 %v170
    %v370 = vunpack.c.l.b16 %v171
    %v371 = vunpack.c.l.b16 %v172
    %v372 = vunpack.c.l.b16 %v173
    %v373 = vunpack.c.l.b16 %v174
    %v374 = vunpack.c.l.b16 %v175
    %v375 = vunpack.c.l.b16 %v176
    %v376 = vunpack.c.l.b16 %v177
    %v377 = vunpack.c.l.b16 %v178
    %v378 = vunpack.c.l.b16 %v179
    %v379 = vunpack.c.l.b16 %v180
    %v380 = vunpack.c.l.b16 %v181
    %v381 = vunpack.c.l.b16 %v182
    %v382 = vunpack.c.l.b16 %v183
    %v383 = vunpack.c.l.b16 %v184
    %v384 = vunpack.c.l.b16 %v185
    %v385 = vunpack.c.l.b16 %v186
    %v386 = vunpack.c.l.b16 %v187
    %v387 = vunpack.c.l.b16 %v188
    %v388 = vunpack.c.l.b16 %v189
    %v389 = vunpack.c.l.b16 %v190
    %v390 = vunpack.c.l.b16 %v191
    %v391 = vunpack.c.l.b16 %v192
    %v392 = vunpack.c.l.b16 %v193
    %v393 = vunpack.c.l.b16 %v194
    %v394 = vpack.c.b16 %v299, %v298
    %v395 = vpack.c.b16 %v301, %v300
    %v396 = vpack.c.b16 %v303, %v302
    %v397 = vpack.c.b16 %v305, %v304
    %v398 = vpack.c.b16 %v307, %v306
    %v399 = vpack.c.b16 %v309, %v308
    %v400 = vpack.c.b16 %v311, %v310
    %v401 = vpack.c.b16 %v313, %v312
    %v402 = vpack.c.b16 %v315, %v314
    %v403 = vpack.c.b16 %v317, %v316
    %v404 = vpack.c.b16 %v319, %v318
    %v405 = vpack.c.b16 %v321, %v320
    %v406 = vpack.c.b16 %v323, %v322
    %v407 = vpack.c.b16 %v325, %v324
    %v408 = vpack.c.b16 %v327, %v326
    %v409 = vpack.c.b16 %v329, %v328
    %v410 = vpack.c.b16 %v331, %v330
    %v411 = vpack.c.b16 %v333, %v332
    %v412 = vpack.c.b16 %v335, %v334
    %v413 = vpack.c.b16 %v337, %v336
    %v414 = vpack.c.b16 %v339, %v338
    %v415 = vpack.c.b16 %v341, %v340
    %v416 = vpack.c.b16 %v343, %v342
    %v417 = vpack.c.b16 %v345, %v344
    %v418 = vpack.c.b16 %v347, %v346
    %v419 = vpack.c.b16 %v349, %v348
    %v420 = vpack.c.b16 %v351, %v350
    %v421 = vpack.c.b16 %v353, %v352
    %v422 = vpack.c.b16 %v355, %v354
    %v423 = vpack.c.b16 %v357, %v356
    %v424 = vpack.c.b16 %v359, %v358
    %v425 = vpack.c.b16 %v361, %v360
    %v426 = vpack.c.b16 %v363, %v362
    %v427 = vpack.c.b16 %v365, %v364
    %v428 = vpack.c.b16 %v367, %v366
    %v429 = vpack.c.b16 %v369, %v368
    %v430 = vpack.c.b16 %v371, %v370
    %v431 = vpack.c.b16 %v373, %v372
    %v432 = vpack.c.b16 %v375, %v374
    %v433 = vpack.c.b16 %v377, %v376
    %v434 = vpack.c.b16 %v379, %v378
    %v435 = vpack.c.b16 %v381, %v380
    %v436 = vpack.c.b16 %v383, %v382
    %v437 = vpack.c.b16 %v385, %v384
    %v438 = vpack.c.b16 %v387, %v386
    %v439 = vpack.c.b16 %v389, %v388
    %v440 = vpack.c.b16 %v391, %v390
    %v441 = vpack.c.b16 %v393, %v392
    %490 = vmatprep.subr.bf16.mxu0 0
    %491 = vmatpush1.bf16.msra.mxu0 %v394
    %492 = vmatprep.subr.bf16.mxu0 0
    %493 = vmatpush1.bf16.msra.mxu0 %v395
    %494 = vmatprep.subr.bf16.mxu0 0
    %495 = vmatpush1.bf16.msra.mxu0 %v396
    %496 = vmatprep.subr.bf16.mxu0 0
    %497 = vmatpush1.bf16.msra.mxu0 %v397
    %498 = vmatprep.subr.bf16.mxu0 0
    %499 = vmatpush1.bf16.msra.mxu0 %v398
    %500 = vmatprep.subr.bf16.mxu0 0
    %501 = vmatpush1.bf16.msra.mxu0 %v399
    %502 = vmatprep.subr.bf16.mxu0 0
    %503 = vmatpush1.bf16.msra.mxu0 %v400
    %504 = vmatprep.subr.bf16.mxu0 0
    %505 = vmatpush1.bf16.msra.mxu0 %v401
    %506 = vmatprep.subr.bf16.mxu0 0
    %507 = vmatpush1.bf16.msra.mxu0 %v402
    %508 = vmatprep.subr.bf16.mxu0 0
    %509 = vmatpush1.bf16.msra.mxu0 %v403
    %510 = vmatprep.subr.bf16.mxu0 0
    %511 = vmatpush1.bf16.msra.mxu0 %v404
    %512 = vmatprep.subr.bf16.mxu0 0
    %513 = vmatpush1.bf16.msra.mxu0 %v405
    %514 = vmatprep.subr.bf16.mxu0 0
    %515 = vmatpush1.bf16.msra.mxu0 %v406
    %516 = vmatprep.subr.bf16.mxu0 0
    %517 = vmatpush1.bf16.msra.mxu0 %v407
    %518 = vmatprep.subr.bf16.mxu0 0
    %519 = vmatpush1.bf16.msra.mxu0 %v408
    %520 = vmatprep.subr.bf16.mxu0 0
    %521 = vmatpush1.bf16.msra.mxu0 %v409
    %522 = vmatprep.mubr.bf16.mxu0 %v94
    %523 = vmatmul.mubr.bf16.gmra.mrb[0].mxu0 %v93
    %v524 = vpop.f32.mrb[0].mxu0
    %v525 = vadd.f32 %v200, %v524
    %v526 = vpop.f32.mrb[0].mxu0
    %v527 = vpop.f32.mrb[0].mxu0
    %v528 = vpop.f32.mrb[0].mxu0
    %529 = vdwg.mxu0
    %530 = vmatprep.subr.bf16.mxu0 0
    %531 = vmatpush1.bf16.msra.mxu0 %v410
    %532 = vmatprep.subr.bf16.mxu0 0
    %533 = vmatpush1.bf16.msra.mxu0 %v411
    %534 = vmatprep.subr.bf16.mxu0 0
    %535 = vmatpush1.bf16.msra.mxu0 %v412
    %536 = vmatprep.subr.bf16.mxu0 0
    %537 = vmatpush1.bf16.msra.mxu0 %v413
    %538 = vmatprep.subr.bf16.mxu0 0
    %539 = vmatpush1.bf16.msra.mxu0 %v414
    %540 = vmatprep.subr.bf16.mxu0 0
    %541 = vmatpush1.bf16.msra.mxu0 %v415
    %542 = vmatprep.subr.bf16.mxu0 0
    %543 = vmatpush1.bf16.msra.mxu0 %v416
    %544 = vmatprep.subr.bf16.mxu0 0
    %545 = vmatpush1.bf16.msra.mxu0 %v417
    %546 = vmatprep.subr.bf16.mxu0 0
    %547 = vmatpush1.bf16.msra.mxu0 %v418
    %548 = vmatprep.subr.bf16.mxu0 0
    %549 = vmatpush1.bf16.msra.mxu0 %v419
    %550 = vmatprep.subr.bf16.mxu0 0
    %551 = vmatpush1.bf16.msra.mxu0 %v420
    %552 = vmatprep.subr.bf16.mxu0 0
    %553 = vmatpush1.bf16.msra.mxu0 %v421
    %554 = vmatprep.subr.bf16.mxu0 0
    %555 = vmatpush1.bf16.msra.mxu0 %v422
    %556 = vmatprep.subr.bf16.mxu0 0
    %557 = vmatpush1.bf16.msra.mxu0 %v423
    %558 = vmatprep.subr.bf16.mxu0 0
    %559 = vmatpush1.bf16.msra.mxu0 %v424
    %560 = vmatprep.subr.bf16.mxu0 0
    %561 = vmatpush1.bf16.msra.mxu0 %v425
    %562 = vmatprep.mubr.bf16.mxu0 %v96
    %563 = vmatmul.mubr.bf16.gmra.mrb[0].mxu0 %v95
    %v564 = vpop.f32.mrb[0].mxu0
    %v565 = vadd.f32 %v525, %v564
    %v566 = vpop.f32.mrb[0].mxu0
    %v567 = vpop.f32.mrb[0].mxu0
    %v568 = vpop.f32.mrb[0].mxu0
    %569 = vdwg.mxu0
    %570 = vmatprep.subr.bf16.mxu0 0
    %571 = vmatpush1.bf16.msra.mxu0 %v426
    %572 = vmatprep.subr.bf16.mxu0 0
    %573 = vmatpush1.bf16.msra.mxu0 %v427
    %574 = vmatprep.subr.bf16.mxu0 0
    %575 = vmatpush1.bf16.msra.mxu0 %v428
    %576 = vmatprep.subr.bf16.mxu0 0
    %577 = vmatpush1.bf16.msra.mxu0 %v429
    %578 = vmatprep.subr.bf16.mxu0 0
    %579 = vmatpush1.bf16.msra.mxu0 %v430
    %580 = vmatprep.subr.bf16.mxu0 0
    %581 = vmatpush1.bf16.msra.mxu0 %v431
    %582 = vmatprep.subr.bf16.mxu0 0
    %583 = vmatpush1.bf16.msra.mxu0 %v432
    %584 = vmatprep.subr.bf16.mxu0 0
    %585 = vmatpush1.bf16.msra.mxu0 %v433
    %586 = vmatprep.subr.bf16.mxu0 0
    %587 = vmatpush1.bf16.msra.mxu0 %v434
    %588 = vmatprep.subr.bf16.mxu0 0
    %589 = vmatpush1.bf16.msra.mxu0 %v435
    %590 = vmatprep.subr.bf16.mxu0 0
    %591 = vmatpush1.bf16.msra.mxu0 %v436
    %592 = vmatprep.subr.bf16.mxu0 0
    %593 = vmatpush1.bf16.msra.mxu0 %v437
    %594 = vmatprep.subr.bf16.mxu0 0
    %595 = vmatpush1.bf16.msra.mxu0 %v438
    %596 = vmatprep.subr.bf16.mxu0 0
    %597 = vmatpush1.bf16.msra.mxu0 %v439
    %598 = vmatprep.subr.bf16.mxu0 0
    %599 = vmatpush1.bf16.msra.mxu0 %v440
    %600 = vmatprep.subr.bf16.mxu0 0
    %601 = vmatpush1.bf16.msra.mxu0 %v441
    %602 = vmatprep.mubr.bf16.mxu0 %v98
    %603 = vmatmul.mubr.bf16.gmra.mrb[0].mxu0 %v97
    %v604 = vpop.f32.mrb[0].mxu0
    %v605 = vadd.f32 %v565, %v604
    %v606 = vpop.f32.mrb[0].mxu0
    %v607 = vpop.f32.mrb[0].mxu0
    %v608 = vpop.f32.mrb[0].mxu0
    %609 = vdwg.mxu0
    %v610 = vld [vmem:[%s3] sm:$0x1]
    %v611 = vld [vmem:[%s4] sm:$0x1]
    %v612 = vrot.slane %v605, 4
    %v613 = vadd.f32 %v605, %v612
    %v614 = vrot.slane %v613, 2
    %v615 = vadd.f32 %v613, %v614
    %v616 = vrot.slane %v615, 1
    %v617 = vadd.f32 %v615, %v616
    %v618 = vrcp.pop 8.0
    %v619 = vmul.f32 %v617, %v618
    %v620 = vsub.f32 %v605, %v619
    %v621 = vmul.f32 %v620, %v620
    %v622 = vrot.slane %v621, 4
    %v623 = vadd.f32 %v621, %v622
    %v624 = vrot.slane %v623, 2
    %v625 = vadd.f32 %v623, %v624
    %v626 = vrot.slane %v625, 1
    %v627 = vadd.f32 %v625, %v626
    %v628 = vmul.f32 %v627, %v618
    %v629 = vadd.f32 %v628, 1e-05
    %v630 = vrsqrt.pop %v629
    %v631 = vmul.f32 %v620, %v630
    %v633 = vlaneseq
    %v634 = vshrl.u32 %v633, 7
    %v635 = vsub.s32 0, %v634
    %v636 = vrot.slane %v610, %v635
    %v638 = vmul.f32 %v631, %v636
    %v640 = vlaneseq
    %v641 = vshrl.u32 %v640, 7
    %v642 = vsub.s32 0, %v641
    %v643 = vrot.slane %v611, %v642
    %v645 = vadd.f32 %v638, %v643
    %v646 = vmax.f32 %v645, 0.0
    %v647 = vpack.c.bf16 %v646, %v646
    %v648 = vld [vmem:[#allocation7] sm:$0xf]
    %v649 = vld [vmem:[#allocation7 + $0x4] sm:$0xf]
    %v650 = vld [vmem:[#allocation7 + $0x8] sm:$0xf]
    %v651 = vld [vmem:[#allocation7 + $0xc] sm:$0xf]
    %v652 = vld [vmem:[#allocation7 + $0x10] sm:$0xf]
    %v653 = vld [vmem:[#allocation7 + $0x14] sm:$0xf]
    %v654 = vld [vmem:[#allocation7 + $0x18] sm:$0xf]
    %v655 = vld [vmem:[#allocation7 + $0x1c] sm:$0xf]
    %v656 = vld [vmem:[#allocation7 + $0x20] sm:$0xf]
    %v657 = vld [vmem:[#allocation7 + $0x24] sm:$0xf]
    %v658 = vld [vmem:[#allocation7 + $0x28] sm:$0xf]
    %v659 = vld [vmem:[#allocation7 + $0x2c] sm:$0xf]
    %v660 = vld [vmem:[#allocation7 + $0x30] sm:$0xf]
    %v661 = vld [vmem:[#allocation7 + $0x34] sm:$0xf]
    %v662 = vld [vmem:[#allocation7 + $0x38] sm:$0xf]
    %v663 = vld [vmem:[#allocation7 + $0x3c] sm:$0xf]
    %v680 = vunpack.c.l.b16 %v648
    %v681 = vunpack.c.l.b16 %v649
    %v682 = vunpack.c.l.b16 %v650
    %v683 = vunpack.c.l.b16 %v651
    %v684 = vunpack.c.l.b16 %v652
    %v685 = vunpack.c.l.b16 %v653
    %v686 = vunpack.c.l.b16 %v654
    %v687 = vunpack.c.l.b16 %v655
    %v688 = vunpack.c.l.b16 %v656
    %v689 = vunpack.c.l.b16 %v657
    %v690 = vunpack.c.l.b16 %v658
    %v691 = vunpack.c.l.b16 %v659
    %v692 = vunpack.c.l.b16 %v660
    %v693 = vunpack.c.l.b16 %v661
    %v694 = vunpack.c.l.b16 %v662
    %v695 = vunpack.c.l.b16 %v663
    %v696 = vpack.c.b16 %v681, %v680
    %v697 = vpack.c.b16 %v683, %v682
    %v698 = vpack.c.b16 %v685, %v684
    %v699 = vpack.c.b16 %v687, %v686
    %v700 = vpack.c.b16 %v689, %v688
    %v701 = vpack.c.b16 %v691, %v690
    %v702 = vpack.c.b16 %v693, %v692
    %v703 = vpack.c.b16 %v695, %v694
    %712 = vmatprep.subr.bf16.mxu0 0
    %713 = vmatpush1.bf16.msra.mxu0 %v696
    %714 = vmatprep.subr.bf16.mxu0 0
    %715 = vmatpush1.bf16.msra.mxu0 %v697
    %716 = vmatprep.subr.bf16.mxu0 0
    %717 = vmatpush1.bf16.msra.mxu0 %v698
    %718 = vmatprep.subr.bf16.mxu0 0
    %719 = vmatpush1.bf16.msra.mxu0 %v699
    %720 = vmatprep.subr.bf16.mxu0 0
    %721 = vmatpush1.bf16.msra.mxu0 %v700
    %722 = vmatprep.subr.bf16.mxu0 0
    %723 = vmatpush1.bf16.msra.mxu0 %v701
    %724 = vmatprep.subr.bf16.mxu0 0
    %725 = vmatpush1.bf16.msra.mxu0 %v702
    %726 = vmatprep.subr.bf16.mxu0 0
    %727 = vmatpush1.bf16.msra.mxu0 %v703
    %728 = vmatprep.subr.bf16.mxu0 0
    %729 = vmatpush1.bf16.msra.mxu0 0
    %730 = vmatprep.subr.bf16.mxu0 0
    %731 = vmatpush1.bf16.msra.mxu0 0
    %732 = vmatprep.subr.bf16.mxu0 0
    %733 = vmatpush1.bf16.msra.mxu0 0
    %734 = vmatprep.subr.bf16.mxu0 0
    %735 = vmatpush1.bf16.msra.mxu0 0
    %736 = vmatprep.subr.bf16.mxu0 0
    %737 = vmatpush1.bf16.msra.mxu0 0
    %738 = vmatprep.subr.bf16.mxu0 0
    %739 = vmatpush1.bf16.msra.mxu0 0
    %740 = vmatprep.subr.bf16.mxu0 0
    %741 = vmatpush1.bf16.msra.mxu0 0
    %742 = vmatprep.subr.bf16.mxu0 0
    %743 = vmatpush1.bf16.msra.mxu0 0
    %744 = vmatprep.mubr.bf16.mxu0 0
    %745 = vmatmul.mubr.bf16.gmra.mrb[0].mxu0 %v647
    %v746 = vpop.f32.mrb[0].mxu0
    %v747 = vadd.f32 0.0, %v746
    %v748 = vpop.f32.mrb[0].mxu0
    %v749 = vpop.f32.mrb[0].mxu0
    %v750 = vpop.f32.mrb[0].mxu0
    %751 = vdwg.mxu0
    %v752 = vld [vmem:[%s6] sm:$0x1]
    %v753 = vld [vmem:[%s7] sm:$0x1]
    %v754 = vrot.slane %v747, 4
    %v755 = vadd.f32 %v747, %v754
    %v756 = vrot.slane %v755, 2
    %v757 = vadd.f32 %v755, %v756
    %v758 = vrot.slane %v757, 1
    %v759 = vadd.f32 %v757, %v758
    %v760 = vmul.f32 %v759, %v618
    %v761 = vsub.f32 %v747, %v760
    %v762 = vmul.f32 %v761, %v761
    %v763 = vrot.slane %v762, 4
    %v764 = vadd.f32 %v762, %v763
    %v765 = vrot.slane %v764, 2
    %v766 = vadd.f32 %v764, %v765
    %v767 = vrot.slane %v766, 1
    %v768 = vadd.f32 %v766, %v767
    %v769 = vmul.f32 %v768, %v618
    %v770 = vadd.f32 %v769, 1e-05
    %v771 = vrsqrt.pop %v770
    %v772 = vmul.f32 %v761, %v771
    %v774 = vlaneseq
    %v775 = vshrl.u32 %v774, 7
    %v776 = vsub.s32 0, %v775
    %v777 = vrot.slane %v752, %v776
    %v779 = vmul.f32 %v772, %v777
    %v781 = vlaneseq
    %v782 = vshrl.u32 %v781, 7
    %v783 = vsub.s32 0, %v782
    %v784 = vrot.slane %v753, %v783
    %v786 = vadd.f32 %v779, %v784
    %v787 = vmax.f32 %v786, 0.0
    %v788 = vpack.c.bf16 %v787, %v787
    %v789 = vld [vmem:[#allocation8] sm:$0xff]
    %v790 = vld [vmem:[#allocation8 + $0x8] sm:$0xff]
    %v791 = vld [vmem:[#allocation8 + $0x10] sm:$0xff]
    %v792 = vld [vmem:[#allocation8 + $0x18] sm:$0xff]
    %v793 = vld [vmem:[#allocation8 + $0x20] sm:$0xff]
    %v794 = vld [vmem:[#allocation8 + $0x28] sm:$0xff]
    %v795 = vld [vmem:[#allocation8 + $0x30] sm:$0xff]
    %v796 = vld [vmem:[#allocation8 + $0x38] sm:$0xff]
    %v797 = vld [vmem:[#allocation8 + $0x40] sm:$0xff]
    %v798 = vld [vmem:[#allocation8 + $0x48] sm:$0xff]
    %v799 = vld [vmem:[#allocation8 + $0x50] sm:$0xff]
    %v800 = vld [vmem:[#allocation8 + $0x58] sm:$0xff]
    %v801 = vld [vmem:[#allocation8 + $0x60] sm:$0xff]
    %v802 = vld [vmem:[#allocation8 + $0x68] sm:$0xff]
    %v803 = vld [vmem:[#allocation8 + $0x70] sm:$0xff]
    %v804 = vld [vmem:[#allocation8 + $0x78] sm:$0xff]
    %v821 = vunpack.c.l.b16 %v789
    %v822 = vunpack.c.h.b16 %v789
    %v823 = vunpack.c.l.b16 %v790
    %v824 = vunpack.c.h.b16 %v790
    %v825 = vunpack.c.l.b16 %v791
    %v826 = vunpack.c.h.b16 %v791
    %v827 = vunpack.c.l.b16 %v792
    %v828 = vunpack.c.h.b16 %v792
    %v829 = vunpack.c.l.b16 %v793
    %v830 = vunpack.c.h.b16 %v793
    %v831 = vunpack.c.l.b16 %v794
    %v832 = vunpack.c.h.b16 %v794
    %v833 = vunpack.c.l.b16 %v795
    %v834 = vunpack.c.h.b16 %v795
    %v835 = vunpack.c.l.b16 %v796
    %v836 = vunpack.c.h.b16 %v796
    %v837 = vunpack.c.l.b16 %v797
    %v838 = vunpack.c.h.b16 %v797
    %v839 = vunpack.c.l.b16 %v798
    %v840 = vunpack.c.h.b16 %v798
    %v841 = vunpack.c.l.b16 %v799
    %v842 = vunpack.c.h.b16 %v799
    %v843 = vunpack.c.l.b16 %v800
    %v844 = vunpack.c.h.b16 %v800
    %v845 = vunpack.c.l.b16 %v801
    %v846 = vunpack.c.h.b16 %v801
    %v847 = vunpack.c.l.b16 %v802
    %v848 = vunpack.c.h.b16 %v802
    %v849 = vunpack.c.l.b16 %v803
    %v850 = vunpack.c.h.b16 %v803
    %v851 = vunpack.c.l.b16 %v804
    %v852 = vunpack.c.h.b16 %v804
    %v853 = vpack.c.b16 %v823, %v821
    %v854 = vpack.c.b16 %v824, %v822
    %v855 = vpack.c.b16 %v827, %v825
    %v856 = vpack.c.b16 %v828, %v826
    %v857 = vpack.c.b16 %v831, %v829
    %v858 = vpack.c.b16 %v832, %v830
    %v859 = vpack.c.b16 %v835, %v833
    %v860 = vpack.c.b16 %v836, %v834
    %v861 = vpack.c.b16 %v839, %v837
    %v862 = vpack.c.b16 %v840, %v838
    %v863 = vpack.c.b16 %v843, %v841
    %v864 = vpack.c.b16 %v844, %v842
    %v865 = vpack.c.b16 %v847, %v845
    %v866 = vpack.c.b16 %v848, %v846
    %v867 = vpack.c.b16 %v851, %v849
    %v868 = vpack.c.b16 %v852, %v850
    %885 = vmatprep.subr.bf16.mxu0 %v854
    %886 = vmatpush1.bf16.msra.mxu0 %v853
    %887 = vmatprep.subr.bf16.mxu0 %v856
    %888 = vmatpush1.bf16.msra.mxu0 %v855
    %889 = vmatprep.subr.bf16.mxu0 %v858
    %890 = vmatpush1.bf16.msra.mxu0 %v857
    %891 = vmatprep.subr.bf16.mxu0 %v860
    %892 = vmatpush1.bf16.msra.mxu0 %v859
    %893 = vmatprep.subr.bf16.mxu0 %v862
    %894 = vmatpush1.bf16.msra.mxu0 %v861
    %895 = vmatprep.subr.bf16.mxu0 %v864
    %896 = vmatpush1.bf16.msra.mxu0 %v863
    %897 = vmatprep.subr.bf16.mxu0 %v866
    %898 = vmatpush1.bf16.msra.mxu0 %v865
    %899 = vmatprep.subr.bf16.mxu0 %v868
    %900 = vmatpush1.bf16.msra.mxu0 %v867
    %901 = vmatprep.subr.bf16.mxu0 0
    %902 = vmatpush1.bf16.msra.mxu0 0
    %903 = vmatprep.subr.bf16.mxu0 0
    %904 = vmatpush1.bf16.msra.mxu0 0
    %905 = vmatprep.subr.bf16.mxu0 0
    %906 = vmatpush1.bf16.msra.mxu0 0
    %907 = vmatprep.subr.bf16.mxu0 0
    %908 = vmatpush1.bf16.msra.mxu0 0
    %909 = vmatprep.subr.bf16.mxu0 0
    %910 = vmatpush1.bf16.msra.mxu0 0
    %911 = vmatprep.subr.bf16.mxu0 0
    %912 = vmatpush1.bf16.msra.mxu0 0
    %913 = vmatprep.subr.bf16.mxu0 0
    %914 = vmatpush1.bf16.msra.mxu0 0
    %915 = vmatprep.subr.bf16.mxu0 0
    %916 = vmatpush1.bf16.msra.mxu0 0
    %917 = vmatprep.mubr.bf16.mxu0 0
    %918 = vmatmul.mubr.bf16.gmra.mrb[0].mxu0 %v788
    %v919 = vpop.f32.mrb[0].mxu0
    %v920 = vadd.f32 0.0, %v919
    %v921 = vpop.f32.mrb[0].mxu0
    %v922 = vadd.f32 0.0, %v921
    %v923 = vpop.f32.mrb[0].mxu0
    %v924 = vpop.f32.mrb[0].mxu0
    %925 = vdwg.mxu0
    %v926 = vrot.slane %v920, 4
    %v927 = vadd.f32 %v920, %v926
    %v928 = vrot.slane %v927, 2
    %v929 = vadd.f32 %v927, %v928
    %v930 = vrot.slane %v929, 1
    %v931 = vadd.f32 %v929, %v930
    %v932 = vrot.slane %v922, 4
    %v933 = vadd.f32 %v922, %v932
    %v934 = vrot.slane %v933, 2
    %v935 = vadd.f32 %v933, %v934
    %v936 = vrot.slane %v935, 1
    %v937 = vadd.f32 %v935, %v936
    %v938 = vmul.f32 %v931, %v618
    %v939 = vmul.f32 %v937, %v618
    %v940 = vsub.f32 %v920, %v938
    %v941 = vsub.f32 %v922, %v939
    %v942 = vmul.f32 %v940, %v940
    %v943 = vmul.f32 %v941, %v941
    %v944 = vrot.slane %v942, 4
    %v945 = vadd.f32 %v942, %v944
    %v946 = vrot.slane %v945, 2
    %v947 = vadd.f32 %v945, %v946
    %v948 = vrot.slane %v947, 1
    %v949 = vadd.f32 %v947, %v948
    %v950 = vrot.slane %v943, 4
    %v951 = vadd.f32 %v943, %v950
    %v952 = vrot.slane %v951, 2
    %v953 = vadd.f32 %v951, %v952
    %v954 = vrot.slane %v953, 1
    %v955 = vadd.f32 %v953, %v954
    %v956 = vmul.f32 %v949, %v618
    %v957 = vmul.f32 %v955, %v618
    %v958 = vadd.f32 %v956, 1e-05
    %v959 = vadd.f32 %v957, 1e-05
    %v960 = vrsqrt.pop %v958
    %v961 = vrsqrt.pop %v959
    %v962 = vmul.f32 %v940, %v960
    %v963 = vmul.f32 %v941, %v961
    %964 = vxpose.xlu0.b32.start [1/16] %v962, 128
    %965 = vxpose.xlu0.b32.cont [2/16] 0.0, 128
    %966 = vxpose.xlu0.b32.cont [3/16] 0.0, 128
    %967 = vxpose.xlu0.b32.cont [4/16] 0.0, 128
    %968 = vxpose.xlu0.b32.cont [5/16] 0.0, 128
    %969 = vxpose.xlu0.b32.cont [6/16] 0.0, 128
    %970 = vxpose.xlu0.b32.cont [7/16] 0.0, 128
    %971 = vxpose.xlu0.b32.cont [8/16] 0.0, 128
    %972 = vxpose.xlu0.b32.cont [9/16] 0.0, 128
    %973 = vxpose.xlu0.b32.cont [10/16] 0.0, 128
    %974 = vxpose.xlu0.b32.cont [11/16] 0.0, 128
    %975 = vxpose.xlu0.b32.cont [12/16] 0.0, 128
    %976 = vxpose.xlu0.b32.cont [13/16] 0.0, 128
    %977 = vxpose.xlu0.b32.cont [14/16] 0.0, 128
    %978 = vxpose.xlu0.b32.cont [15/16] 0.0, 128
    %979 = vxpose.xlu0.b32.end [16/16] 0.0, 128
    %v980 = vpop.trf.xlu0
    %v981 = vpop.trf.xlu0
    %v982 = vpop.trf.xlu0
    %v983 = vpop.trf.xlu0
    %v984 = vpop.trf.xlu0
    %v985 = vpop.trf.xlu0
    %v986 = vpop.trf.xlu0
    %v987 = vpop.trf.xlu0
    %v988 = vpop.trf.xlu0
    %v989 = vpop.trf.xlu0
    %v990 = vpop.trf.xlu0
    %v991 = vpop.trf.xlu0
    %v992 = vpop.trf.xlu0
    %v993 = vpop.trf.xlu0
    %v994 = vpop.trf.xlu0
    %v995 = vpop.trf.xlu0
    %vm996 = vcmask 64512
    %v998 = vsel %vm996, %v980, 0
    %v1001 = vsel %vm996, %v981, 0
    %v1004 = vsel %vm996, %v982, 0
    %v1007 = vsel %vm996, %v983, 0
    %v1010 = vsel %vm996, %v984, 0
    %v1013 = vsel %vm996, %v985, 0
    %v1016 = vsel %vm996, %v986, 0
    %v1019 = vsel %vm996, %v987, 0
    %v1022 = vsel %vm996, %v988, 0
    %v1025 = vsel %vm996, %v989, 0
    %v1028 = vsel %vm996, %v990, 0
    %v1031 = vsel %vm996, %v991, 0
    %v1034 = vsel %vm996, %v992, 0
    %v1037 = vsel %vm996, %v993, 0
    %v1040 = vsel %vm996, %v994, 0
    %v1043 = vsel %vm996, %v995, 0
    %1045 = vmatprep.subr.mxu0 0.0
    %1046 = vmatpush1.msra.mxu0 %v963
    %1047 = vmatprep.subr.mxu0 0.0
    %1048 = vmatpush1.msra.mxu0 0.0
    %1049 = vmatprep.subr.mxu0 0.0
    %1050 = vmatpush1.msra.mxu0 0.0
    %1051 = vmatprep.subr.mxu0 0.0
    %1052 = vmatpush1.msra.mxu0 0.0
    %1053 = vmatprep.subr.mxu0 0.0
    %1054 = vmatpush1.msra.mxu0 0.0
    %1055 = vmatprep.subr.mxu0 0.0
    %1056 = vmatpush1.msra.mxu0 0.0
    %1057 = vmatprep.subr.mxu0 0.0
    %1058 = vmatpush1.msra.mxu0 0.0
    %1059 = vmatprep.subr.mxu0 0.0
    %1060 = vmatpush1.msra.mxu0 0.0
    %1061 = vmatprep.subr.mxu0 0.0
    %1062 = vmatpush1.msra.mxu0 0.0
    %1063 = vmatprep.subr.mxu0 0.0
    %1064 = vmatpush1.msra.mxu0 0.0
    %1065 = vmatprep.subr.mxu0 0.0
    %1066 = vmatpush1.msra.mxu0 0.0
    %1067 = vmatprep.subr.mxu0 0.0
    %1068 = vmatpush1.msra.mxu0 0.0
    %1069 = vmatprep.subr.mxu0 0.0
    %1070 = vmatpush1.msra.mxu0 0.0
    %1071 = vmatprep.subr.mxu0 0.0
    %1072 = vmatpush1.msra.mxu0 0.0
    %1073 = vmatprep.subr.mxu0 0.0
    %1074 = vmatpush1.msra.mxu0 0.0
    %1075 = vmatprep.subr.mxu0 0.0
    %1076 = vmatpush1.msra.mxu0 0.0
    %1077 = vmatprep.subr.mxu0 0.0
    %1078 = vmatpush1.msra.mxu0 0.0
    %1079 = vmatprep.subr.mxu0 0.0
    %1080 = vmatpush1.msra.mxu0 0.0
    %1081 = vmatprep.subr.mxu0 0.0
    %1082 = vmatpush1.msra.mxu0 0.0
    %1083 = vmatprep.subr.mxu0 0.0
    %1084 = vmatpush1.msra.mxu0 0.0
    %1085 = vmatprep.subr.mxu0 0.0
    %1086 = vmatpush1.msra.mxu0 0.0
    %1087 = vmatprep.subr.mxu0 0.0
    %1088 = vmatpush1.msra.mxu0 0.0
    %1089 = vmatprep.subr.mxu0 0.0
    %1090 = vmatpush1.msra.mxu0 0.0
    %1091 = vmatprep.subr.mxu0 0.0
    %1092 = vmatpush1.msra.mxu0 0.0
    %1093 = vmatprep.subr.mxu0 0.0
    %1094 = vmatpush1.msra.mxu0 0.0
    %1095 = vmatprep.subr.mxu0 0.0
    %1096 = vmatpush1.msra.mxu0 0.0
    %1097 = vmatprep.subr.mxu0 0.0
    %1098 = vmatpush1.msra.mxu0 0.0
    %1099 = vmatprep.subr.mxu0 0.0
    %1100 = vmatpush1.msra.mxu0 0.0
    %1101 = vmatprep.subr.mxu0 0.0
    %1102 = vmatpush1.msra.mxu0 0.0
    %1103 = vmatprep.subr.mxu0 0.0
    %1104 = vmatpush1.msra.mxu0 0.0
    %1105 = vmatprep.subr.mxu0 0.0
    %1106 = vmatpush1.msra.mxu0 0.0
    %1107 = vmatprep.subr.mxu0 0.0
    %1108 = vmatpush1.msra.mxu0 0.0
    %1109 = vmatprep.mubr.f32.mxu0 0.0
    %1110 = vmatmul.mubr.f32.gmra.mrb[0].mxu0 %v998
    %v1111 = vpop.f32.mrb[0].mxu0
    %v1112 = vadd.f32 0.0, %v1111
    %v1113 = vpop.f32.mrb[0].mxu0
    %1114 = vmatprep.mubr.f32.mxu0 0.0
    %1115 = vmatmul.mubr.f32.gmra.mrb[0].mxu0 %v1001
    %v1116 = vpop.f32.mrb[0].mxu0
    %v1117 = vadd.f32 0.0, %v1116
    %v1118 = vpop.f32.mrb[0].mxu0
    %1119 = vmatprep.mubr.f32.mxu0 0.0
    %1120 = vmatmul.mubr.f32.gmra.mrb[0].mxu0 %v1004
    %v1121 = vpop.f32.mrb[0].mxu0
    %v1122 = vadd.f32 0.0, %v1121
    %v1123 = vpop.f32.mrb[0].mxu0
    %1124 = vmatprep.mubr.f32.mxu0 0.0
    %1125 = vmatmul.mubr.f32.gmra.mrb[0].mxu0 %v1007
    %v1126 = vpop.f32.mrb[0].mxu0
    %v1127 = vadd.f32 0.0, %v1126
    %v1128 = vpop.f32.mrb[0].mxu0
    %1129 = vmatprep.mubr.f32.mxu0 0.0
    %1130 = vmatmul.mubr.f32.gmra.mrb[0].mxu0 %v1010
    %v1131 = vpop.f32.mrb[0].mxu0
    %v1132 = vadd.f32 0.0, %v1131
    %v1133 = vpop.f32.mrb[0].mxu0
    %1134 = vmatprep.mubr.f32.mxu0 0.0
    %1135 = vmatmul.mubr.f32.gmra.mrb[0].mxu0 %v1013
    %v1136 = vpop.f32.mrb[0].mxu0
    %v1137 = vadd.f32 0.0, %v1136
    %v1138 = vpop.f32.mrb[0].mxu0
    %1139 = vmatprep.mubr.f32.mxu0 0.0
    %1140 = vmatmul.mubr.f32.gmra.mrb[0].mxu0 %v1016
    %v1141 = vpop.f32.mrb[0].mxu0
    %v1142 = vadd.f32 0.0, %v1141
    %v1143 = vpop.f32.mrb[0].mxu0
    %1144 = vmatprep.mubr.f32.mxu0 0.0
    %1145 = vmatmul.mubr.f32.gmra.mrb[0].mxu0 %v1019
    %v1146 = vpop.f32.mrb[0].mxu0
    %v1147 = vadd.f32 0.0, %v1146
    %v1148 = vpop.f32.mrb[0].mxu0
    %1149 = vmatprep.mubr.f32.mxu0 0.0
    %1150 = vmatmul.mubr.f32.gmra.mrb[0].mxu0 %v1022
    %v1151 = vpop.f32.mrb[0].mxu0
    %v1152 = vadd.f32 0.0, %v1151
    %v1153 = vpop.f32.mrb[0].mxu0
    %1154 = vmatprep.mubr.f32.mxu0 0.0
    %1155 = vmatmul.mubr.f32.gmra.mrb[0].mxu0 %v1025
    %v1156 = vpop.f32.mrb[0].mxu0
    %v1157 = vadd.f32 0.0, %v1156
    %v1158 = vpop.f32.mrb[0].mxu0
    %1159 = vmatprep.mubr.f32.mxu0 0.0
    %1160 = vmatmul.mubr.f32.gmra.mrb[0].mxu0 %v1028
    %v1161 = vpop.f32.mrb[0].mxu0
    %v1162 = vadd.f32 0.0, %v1161
    %v1163 = vpop.f32.mrb[0].mxu0
    %1164 = vmatprep.mubr.f32.mxu0 0.0
    %1165 = vmatmul.mubr.f32.gmra.mrb[0].mxu0 %v1031
    %v1166 = vpop.f32.mrb[0].mxu0
    %v1167 = vadd.f32 0.0, %v1166
    %v1168 = vpop.f32.mrb[0].mxu0
    %1169 = vmatprep.mubr.f32.mxu0 0.0
    %1170 = vmatmul.mubr.f32.gmra.mrb[0].mxu0 %v1034
    %v1171 = vpop.f32.mrb[0].mxu0
    %v1172 = vadd.f32 0.0, %v1171
    %v1173 = vpop.f32.mrb[0].mxu0
    %1174 = vmatprep.mubr.f32.mxu0 0.0
    %1175 = vmatmul.mubr.f32.gmra.mrb[0].mxu0 %v1037
    %v1176 = vpop.f32.mrb[0].mxu0
    %v1177 = vadd.f32 0.0, %v1176
    %v1178 = vpop.f32.mrb[0].mxu0
    %1179 = vmatprep.mubr.f32.mxu0 0.0
    %1180 = vmatmul.mubr.f32.gmra.mrb[0].mxu0 %v1040
    %v1181 = vpop.f32.mrb[0].mxu0
    %v1182 = vadd.f32 0.0, %v1181
    %v1183 = vpop.f32.mrb[0].mxu0
    %1184 = vmatprep.mubr.f32.mxu0 0.0
    %1185 = vmatmul.mubr.f32.gmra.mrb[0].mxu0 %v1043
    %v1186 = vpop.f32.mrb[0].mxu0
    %v1187 = vadd.f32 0.0, %v1186
    %v1188 = vpop.f32.mrb[0].mxu0
    %1189 = vdwg.mxu0
    %v1190 = vmul.f32 %v1112, 0.125
    %v1191 = vmul.f32 %v1117, 0.125
    %v1192 = vmul.f32 %v1122, 0.125
    %v1193 = vmul.f32 %v1127, 0.125
    %v1194 = vmul.f32 %v1132, 0.125
    %v1195 = vmul.f32 %v1137, 0.125
    %v1196 = vmul.f32 %v1142, 0.125
    %v1197 = vmul.f32 %v1147, 0.125
    %v1198 = vmul.f32 %v1152, 0.125
    %v1199 = vmul.f32 %v1157, 0.125
    %v1200 = vmul.f32 %v1162, 0.125
    %v1201 = vmul.f32 %v1167, 0.125
    %v1202 = vmul.f32 %v1172, 0.125
    %v1203 = vmul.f32 %v1177, 0.125
    %v1204 = vmul.f32 %v1182, 0.125
    %v1205 = vmul.f32 %v1187, 0.125
    %v1206 = vmul.f32 %v962, %v963
    %v1207 = vrot.slane %v1206, 4
    %v1208 = vadd.f32 %v1206, %v1207
    %v1209 = vrot.slane %v1208, 2
    %v1210 = vadd.f32 %v1208, %v1209
    %v1211 = vrot.slane %v1210, 1
    %v1212 = vadd.f32 %v1210, %v1211
    %v1213 = vmul.f32 %v1212, 0.125
    %v1214 = vmul.f32 %v1190, %v1190
    %v1215 = vmul.f32 %v1191, %v1191
    %v1216 = vmul.f32 %v1192, %v1192
    %v1217 = vmul.f32 %v1193, %v1193
    %v1218 = vmul.f32 %v1194, %v1194
    %v1219 = vmul.f32 %v1195, %v1195
    %v1220 = vmul.f32 %v1196, %v1196
    %v1221 = vmul.f32 %v1197, %v1197
    %v1222 = vmul.f32 %v1198, %v1198
    %v1223 = vmul.f32 %v1199, %v1199
    %v1224 = vmul.f32 %v1200, %v1200
    %v1225 = vmul.f32 %v1201, %v1201
    %v1226 = vmul.f32 %v1202, %v1202
    %v1227 = vmul.f32 %v1203, %v1203
    %v1228 = vmul.f32 %v1204, %v1204
    %v1229 = vmul.f32 %v1205, %v1205
    %v1230 = vadd.f32 %v1214, %v1215
    %v1231 = vadd.f32 %v1230, %v1216
    %v1232 = vadd.f32 %v1231, %v1217
    %v1233 = vadd.f32 %v1232, %v1218
    %v1234 = vadd.f32 %v1233, %v1219
    %v1235 = vadd.f32 %v1234, %v1220
    %v1236 = vadd.f32 %v1235, %v1221
    %v1237 = vadd.f32 %v1236, %v1222
    %v1238 = vadd.f32 %v1237, %v1223
    %v1239 = vadd.f32 %v1238, %v1224
    %v1240 = vadd.f32 %v1239, %v1225
    %v1241 = vadd.f32 %v1240, %v1226
    %v1242 = vadd.f32 %v1241, %v1227
    %v1243 = vadd.f32 %v1242, %v1228
    %v1244 = vadd.f32 %v1243, %v1229
    %1245 = vadd.xlane.f32.xlu0 %v1244
    %v1246 = vpop.xlane.xlu0 %1245
    %v1247 = vrot.slane %v1246, 4
    %v1248 = vadd.f32 %v1246, %v1247
    %v1249 = vrot.slane %v1248, 2
    %v1250 = vadd.f32 %v1248, %v1249
    %v1251 = vrot.slane %v1250, 1
    %v1252 = vadd.f32 %v1250, %v1251
    %s1253 = vtos %v1252
    %v1254 = vmul.f32 %v1213, %v1213
    %vm1255 = vcmask 1040384
    %v1256 = vsel %vm1255, %v1254, 0.0
    %1257 = vadd.xlane.f32.xlu0 %v1256
    %v1258 = vpop.xlane.xlu0 %1257
    %v1259 = vrot.slane %v1258, 4
    %v1260 = vadd.f32 %v1258, %v1259
    %v1261 = vrot.slane %v1260, 2
    %v1262 = vadd.f32 %v1260, %v1261
    %v1263 = vrot.slane %v1262, 1
    %v1264 = vadd.f32 %v1262, %v1263
    %s1265 = vtos %v1264
    %v1266 = vsub.f32 %v1213, 1.0
    %v1267 = vmul.f32 %v1266, %v1266
    %v1268 = vsel %vm1255, %v1267, 0.0
    %1269 = vadd.xlane.f32.xlu0 %v1268
    %v1270 = vpop.xlane.xlu0 %1269
    %v1271 = vrot.slane %v1270, 4
    %v1272 = vadd.f32 %v1270, %v1271
    %v1273 = vrot.slane %v1272, 2
    %v1274 = vadd.f32 %v1272, %v1273
    %v1275 = vrot.slane %v1274, 1
    %v1276 = vadd.f32 %v1274, %v1275
    %s1277 = vtos %v1276
    %s1278 = ssub.f32 %s1253, %s1265
    %s1279 = smul.f32 %s1278, 0.005
    %s1280 = sadd.f32 %s1277, %s1279
    %s1281 = scalar_lea.smem [#allocation10], 0
    %1282 = sst [smem:[%s1281]] %s1280
    // Predicated region
    $region54: #{tpu_custom_call.1} parent=1 // pred_check
      _
    $region55: #{tpu_custom_call.1} parent=1 // pred_check_branch
      %1284 = sbr.rel (0) target = $region57
    $region56: #{tpu_custom_call.1} parent=1 // pred_region
      %s1286 = ssub.s32 16, 16
      %1287 = vsyncadd [#allocation4], %s1286
      %1290 = dma.smem_to_hbm [#allocation10], 16, %s9, [#allocation4]
    $region57: #{tpu_custom_call.1} parent=1 // pred_fallthru
      _
    // Predicated region
    $region58: #{tpu_custom_call.1} parent=1 // pred_check
      _
    $region59: #{tpu_custom_call.1} parent=1 // pred_check_branch
      %1292 = sbr.rel (0) target = $region61
    $region60: #{tpu_custom_call.1} parent=1 // pred_region
      %1293 = dma.done [#allocation4], 16
    $region61: #{tpu_custom_call.1} parent=1 // pred_fallthru
      _
    %1294 = sfence
    %1295 = vsyncpa [#allocation3], 1
    %1296 = vsyncpa [#allocation6], 1
    %1297 = vsyncpa [#allocation9], 1
    %1298 = vsyncpa [#allocation4], 1

</llo_original>
